<compile_context>
chip_gen: v7x
topology: tpu7x:2x2x1
jax: 0.10.0
libtpu: 0.0.40
codegen_flags: <defaults>
</compile_context>

<pallas_src>
import numpy as np
import jax
import jax.numpy as jnp
from jax.experimental import pallas as pl
from jax.experimental.pallas import tpu as pltpu


# ---------------------------------------------------------------------------
# Host-side glue: torch-compatible interpolation matrices.
# ---------------------------------------------------------------------------
def _interp_matrix(in_size: int, out_size: int, method: str) -> np.ndarray:
    if method == "nearest":
        src = np.floor(np.arange(out_size) * (in_size / out_size)).astype(np.int64)
        A = np.zeros((out_size, in_size), np.float32)
        A[np.arange(out_size), np.clip(src, 0, in_size - 1)] = 1.0
        return A
    # 'bilinear' with PyTorch default align_corners=False (half-pixel centers)
    scale = in_size / out_size
    src = (np.arange(out_size, dtype=np.float64) + 0.5) * scale - 0.5
    src = np.clip(src, 0.0, in_size - 1)
    i0 = np.floor(src).astype(np.int64)
    i1 = np.minimum(i0 + 1, in_size - 1)
    frac = (src - i0).astype(np.float32)
    A = np.zeros((out_size, in_size), np.float32)
    A[np.arange(out_size), i0] += 1.0 - frac
    A[np.arange(out_size), i1] += frac
    return A


# ---------------------------------------------------------------------------
# Pallas kernel: per batch block, W-resize matmul then fused (remap ⊗ H-resize).
# ---------------------------------------------------------------------------
def _compute(x_ref, awt_ref, k_ref, b_ref, o_ref):
    Bblk, C, H, W = x_ref.shape
    Wo = awt_ref.shape[1]
    CH = k_ref.shape[1]
    # (1) W-contraction first: one big matmul, contraction on the lane dim,
    #     M = Bblk*C*H.  (reshape is layout-free when H % 8 == 0)
    x2 = x_ref[...].reshape(Bblk * C * H, W)
    t = jnp.dot(x2, awt_ref[...], preferred_element_type=jnp.float32)
    # keep MXU operands in the input dtype (bf16 in -> bf16 matmul, f32 acc)
    t = t.astype(x_ref.dtype).reshape(Bblk, CH, Wo)
    k = k_ref[...]
    for b in range(Bblk):                      # static unroll; Bblk is small
        y = jnp.dot(k, t[b], preferred_element_type=jnp.float32)
        if b_ref is not None:
            y = y + b_ref[...]                 # (Cout*Ho, 1) broadcast over lanes
        o_ref[b] = y.astype(o_ref.dtype)


def _kernel_nobias(x_ref, awt_ref, k_ref, o_ref):
    _compute(x_ref, awt_ref, k_ref, None, o_ref)


def _kernel_bias(x_ref, awt_ref, k_ref, b_ref, o_ref):
    _compute(x_ref, awt_ref, k_ref, b_ref, o_ref)


def _choose_block_b(B, per_image_bytes, budget=4 << 20):
    # Largest divisor of B whose input block fits the budget, while keeping
    # >= 2 grid steps when possible (both TensorCores busy on v7x megacore).
    cap = B if B < 2 else max(1, B // 2)
    best = 1
    for d in range(1, cap + 1):
        if B % d == 0 and d * per_image_bytes <= budget:
            best = d
    return best


def _spatial_rescaler_pallas(x, a_wT, K, bias):
    B, C, H, W = x.shape
    Wo = a_wT.shape[1]
    O = K.shape[0]                                   # Cout * Ho
    itemsize = jnp.dtype(x.dtype).itemsize
    block_b = _choose_block_b(B, C * H * W * itemsize)
    nb = B // block_b

    # Explicit VMEM limit: double-buffered streaming blocks + resident matrices
    # + slack, clamped to [32 MiB, 64 MiB] (safe on v5e/v6e/v7x).
    x_block = block_b * C * H * W * itemsize
    o_block = block_b * O * Wo * itemsize
    const = (W * Wo + O * C * H + O) * 4
    vmem = int(min(64 << 20,
                   max(32 << 20, 2 * x_block + 2 * o_block + const + (8 << 20))))

    in_specs = [
        pl.BlockSpec((block_b, C, H, W), lambda i: (i, 0, 0, 0)),
        pl.BlockSpec((W, Wo), lambda i: (0, 0)),
        pl.BlockSpec((O, C * H), lambda i: (0, 0)),
    ]
    args = [x, a_wT, K]
    kernel = _kernel_nobias
    if bias is not None:
        in_specs.append(pl.BlockSpec((O, 1), lambda i: (0, 0)))
        args.append(bias)
        kernel = _kernel_bias

    out = pl.pallas_call(
        kernel,
        out_shape=jax.ShapeDtypeStruct((B, O, Wo), x.dtype),
        grid=(nb,),
        in_specs=in_specs,
        out_specs=pl.BlockSpec((block_b, O, Wo), lambda i: (i, 0, 0)),
        compiler_params=pltpu.CompilerParams(
            dimension_semantics=("parallel",),
            vmem_limit_bytes=vmem,
        ),
    )(*args)
    return out


# ---------------------------------------------------------------------------
# Module wrapper (parameter setup + host-side operator construction = glue).
# ---------------------------------------------------------------------------
class SpatialRescaler:
    def __init__(self, n_stages=1, method="bilinear", multiplier=0.5,
                 in_channels=3, out_channels=None, bias=False, key=None):
        assert n_stages >= 0
        # TODO(synk): 'linear'/'trilinear' need 3D/5D inputs; 'bicubic'/'area'
        # use different (still separable) stencils and are not implemented here.
        assert method in ["nearest", "bilinear"]
        self.n_stages = n_stages
        self.method = method
        self.multiplier = multiplier
        self.in_channels = in_channels
        self.remap_output = out_channels is not None
        self.out_channels = out_channels if self.remap_output else in_channels

        if self.remap_output:
            key = jax.random.PRNGKey(0) if key is None else key
            wk, bk = jax.random.split(key)
            bound = 1.0 / np.sqrt(in_channels)        # Conv2d(k=1) default init
            self.weight = jax.random.uniform(
                wk, (self.out_channels, in_channels), jnp.float32, -bound, bound)
            self.bias = (jax.random.uniform(
                bk, (self.out_channels,), jnp.float32, -bound, bound)
                if bias else None)
        else:
            self.weight = None
            self.bias = None

    def _composed_stage_matrices(self, H, W):
        a_h = np.eye(H, dtype=np.float32)
        a_w = np.eye(W, dtype=np.float32)
        h, w = H, W
        for _ in range(self.n_stages):
            ho = int(np.floor(h * self.multiplier))
            wo = int(np.floor(w * self.multiplier))
            a_h = _interp_matrix(h, ho, self.method) @ a_h
            a_w = _interp_matrix(w, wo, self.method) @ a_w
            h, w = ho, wo
        return a_h, a_w

    def __call__(self, x):
        B, C, H, W = x.shape
        assert C == self.in_channels
        a_h, a_w = self._composed_stage_matrices(H, W)
        Ho, Wo = a_h.shape[0], a_w.shape[0]
        op_dtype = x.dtype
        # Fuse the 1x1-conv channel remap with the H-resize: K = kron(W_map, A_h).
        w_map = (self.weight if self.remap_output
                 else jnp.eye(C, dtype=jnp.float32))
        K = jnp.kron(w_map, jnp.asarray(a_h)).astype(op_dtype)
        a_wT = jnp.asarray(a_w.T).astype(op_dtype)
        bias_col = None
        if self.bias is not None:
            # bias row for flattened (Cout*Ho) index, kept f32 (added post-acc).
            bias_col = jnp.repeat(self.bias, Ho)[:, None].astype(jnp.float32)
        y = _spatial_rescaler_pallas(x, a_wT, K, bias_col)
        return y.reshape(B, self.out_channels, Ho, Wo)

    def encode(self, x):
        return self(x)


# ---------------------------------------------------------------------------
if __name__ == "__main__":
    key = jax.random.PRNGKey(0)
    kx, kw = jax.random.split(key)

    B, C, H, W = 2, 3, 16, 16
    x = jax.random.normal(kx, (B, C, H, W), dtype=jnp.float32)

    # Test 1: bilinear downscale + 1x1-conv channel remap (with bias).
    m1 = SpatialRescaler(n_stages=1, method="bilinear", multiplier=0.5,
                         in_channels=C, out_channels=4, bias=True, key=kw)
    out1 = jax.block_until_ready(m1(x))
    a_h, a_w = m1._composed_stage_matrices(H, W)
    ref1 = jnp.einsum("oh,bchw->bcow", jnp.asarray(a_h), x)
    ref1 = jnp.einsum("bcow,wv->bcov", ref1, jnp.asarray(a_w.T))
    ref1 = jnp.einsum("kc,bcov->bkov", m1.weight, ref1) + m1.bias[None, :, None, None]
    assert out1.shape == (B, 4, H // 2, W // 2)
    assert jnp.allclose(out1, ref1, atol=1e-4, rtol=1e-4), \
        float(jnp.max(jnp.abs(out1 - ref1)))

    # Test 2: two nearest-neighbor stages, no channel remap.
    m2 = SpatialRescaler(n_stages=2, method="nearest", multiplier=0.5,
                         in_channels=C)
    out2 = jax.block_until_ready(m2(x))
    a_h2, a_w2 = m2._composed_stage_matrices(H, W)
    ref2 = jnp.einsum("oh,bchw->bcow", jnp.asarray(a_h2), x)
    ref2 = jnp.einsum("bcow,wv->bcov", ref2, jnp.asarray(a_w2.T))
    assert out2.shape == (B, C, H // 4, W // 4)
    assert jnp.allclose(out2, ref2, atol=1e-4, rtol=1e-4), \
        float(jnp.max(jnp.abs(out2 - ref2)))

    print("KERNEL_OK")
</pallas_src>

<mosaic_0001>
module attributes {stable_mosaic.version = 11 : i64} {
  func.func @_kernel_bias(%arg0: i32, %arg1: memref<1x3x16x16xf32, #tpu.memory_space<vmem>>, %arg2: memref<16x8xf32, #tpu.memory_space<vmem>>, %arg3: memref<32x48xf32, #tpu.memory_space<vmem>>, %arg4: memref<32x1xf32, #tpu.memory_space<vmem>>, %arg5: memref<1x32x8xf32, #tpu.memory_space<vmem>>) attributes {dimension_semantics = [#tpu.dimension_semantics<parallel>], iteration_bounds = array<i64: 2>, scalar_prefetch = 0 : i64, scratch_operands = 0 : i64, tpu.core_type = #tpu.core_type<tc>, window_params = [{transform_indices = @transform_0, window_bounds = array<i64: 1, 3, 16, 16>}, {pipeline_mode = #tpu.pipeline_mode<synchronous>, transform_indices = @transform_1, window_bounds = array<i64: 16, 8>}, {pipeline_mode = #tpu.pipeline_mode<synchronous>, transform_indices = @transform_2, window_bounds = array<i64: 32, 48>}, {pipeline_mode = #tpu.pipeline_mode<synchronous>, transform_indices = @transform_3, window_bounds = array<i64: 32, 1>}, {transform_indices = @transform_4, window_bounds = array<i64: 1, 32, 8>}]} {
    %c0 = arith.constant 0 : index
    %c0_0 = arith.constant 0 : index
    %c0_1 = arith.constant 0 : index
    %c0_2 = arith.constant 0 : index
    %0 = vector.load %arg1[%c0, %c0_0, %c0_1, %c0_2] : memref<1x3x16x16xf32, #tpu.memory_space<vmem>>, vector<1x3x16x16xf32>
    %1 = vector.shape_cast %0 : vector<1x3x16x16xf32> to vector<48x16xf32>
    %c0_3 = arith.constant 0 : index
    %c0_4 = arith.constant 0 : index
    %2 = vector.load %arg2[%c0_3, %c0_4] : memref<16x8xf32, #tpu.memory_space<vmem>>, vector<16x8xf32>
    %cst = arith.constant dense<0.000000e+00> : vector<48x8xf32>
    %3 = tpu.matmul %1, %2, %cst {dimension_numbers = #tpu.dot_dimension_numbers<[1], [0], [0], [1], [0, 0, 1, 1], [], []>} : vector<48x16xf32>, vector<16x8xf32>, vector<48x8xf32> -> vector<48x8xf32>
    %4 = vector.shape_cast %3 : vector<48x8xf32> to vector<1x48x8xf32>
    %c0_5 = arith.constant 0 : index
    %c0_6 = arith.constant 0 : index
    %5 = vector.load %arg3[%c0_5, %c0_6] : memref<32x48xf32, #tpu.memory_space<vmem>>, vector<32x48xf32>
    %6 = vector.shape_cast %4 : vector<1x48x8xf32> to vector<48x8xf32>
    %cst_7 = arith.constant dense<0.000000e+00> : vector<32x8xf32>
    %7 = tpu.matmul %5, %6, %cst_7 {dimension_numbers = #tpu.dot_dimension_numbers<[1], [0], [0], [1], [0, 0, 1, 1], [], []>} : vector<32x48xf32>, vector<48x8xf32>, vector<32x8xf32> -> vector<32x8xf32>
    %c0_8 = arith.constant 0 : index
    %c0_9 = arith.constant 0 : index
    %8 = vector.load %arg4[%c0_8, %c0_9] : memref<32x1xf32, #tpu.memory_space<vmem>>, vector<32x1xf32>
    %9 = vector.broadcast %8 : vector<32x1xf32> to vector<32x8xf32>
    %10 = arith.addf %7, %9 : vector<32x8xf32>
    %c0_10 = arith.constant 0 : index
    %c0_11 = arith.constant 0 : index
    %c0_12 = arith.constant 0 : index
    %11 = vector.load %arg5[%c0_10, %c0_11, %c0_12] : memref<1x32x8xf32, #tpu.memory_space<vmem>>, vector<1x32x8xf32>
    %12 = vector.shape_cast %11 : vector<1x32x8xf32> to vector<32x8xf32>
    %13 = vector.shape_cast %10 : vector<32x8xf32> to vector<1x32x8xf32>
    tpu.vector_store %arg5[%c0_10, %c0_11, %c0_12], %13 {strides = array<i32>} : memref<1x32x8xf32, #tpu.memory_space<vmem>>, vector<1x32x8xf32>,
    return
  }
  func.func @transform_0(%arg0: i32) -> (i32, i32, i32, i32) {
    %c0_i32 = arith.constant 0 : i32
    %c0_i32_0 = arith.constant 0 : i32
    %c0_i32_1 = arith.constant 0 : i32
    %c0_i32_2 = arith.constant 0 : i32
    return %arg0, %c0_i32, %c0_i32_0, %c0_i32_1 : i32, i32, i32, i32
  }
  func.func @transform_1(%arg0: i32) -> (i32, i32) {
    %c0_i32 = arith.constant 0 : i32
    %c0_i32_0 = arith.constant 0 : i32
    %c0_i32_1 = arith.constant 0 : i32
    return %c0_i32, %c0_i32_0 : i32, i32
  }
  func.func @transform_2(%arg0: i32) -> (i32, i32) {
    %c0_i32 = arith.constant 0 : i32
    %c0_i32_0 = arith.constant 0 : i32
    %c0_i32_1 = arith.constant 0 : i32
    return %c0_i32, %c0_i32_0 : i32, i32
  }
  func.func @transform_3(%arg0: i32) -> (i32, i32) {
    %c0_i32 = arith.constant 0 : i32
    %c0_i32_0 = arith.constant 0 : i32
    %c0_i32_1 = arith.constant 0 : i32
    return %c0_i32, %c0_i32_0 : i32, i32
  }
  func.func @transform_4(%arg0: i32) -> (i32, i32, i32) {
    %c0_i32 = arith.constant 0 : i32
    %c0_i32_0 = arith.constant 0 : i32
    %c0_i32_1 = arith.constant 0 : i32
    return %arg0, %c0_i32, %c0_i32_0 : i32, i32, i32
  }
}

</mosaic_0001>

<llo_original>
// kernel: tpu_custom_call.1
$region0: #{tpu_custom_call.1}
  #allocation0 [shape = 'u32[]', space=smem, size = 0x4, offset = 0x4, fixed_abs, tag = 'smem constant byte address 0x4 - core index']
  #allocation1 [shape = 'u32[144,128]{1,0:T(1,128)}', space=vmem, size = 0x12000, scoped, tag = 'internal scratch']
  %s0 = inlined_call_operand.hbm [shape: f32[2,3,16,16], index: 0, kind: input, shape index: {}]
  %s1 = inlined_call_operand.vmem [shape: f32[16,8], index: 1, kind: input, shape index: {}]
  %s2 = inlined_call_operand.vmem [shape: f32[32,48], index: 2, kind: input, shape index: {}]
  %s3 = inlined_call_operand.vmem [shape: f32[32,1], index: 3, kind: input, shape index: {}]
  %s4 = inlined_call_operand.vmem [shape: f32[2,32,8], index: 4, kind: output, shape index: {}]
  %s5 = sld [smem:[#allocation0]]
  $region53: #{tpu_custom_call.1} parent=0
    _
  %s7 = ssub.s32 1, %s5
  %s8 = scalar_select 0, %s7, %s5
  $region1: #{tpu_custom_call.1} parent=0
    #allocation2 [shape = 'u8[49152]{0}', space=vmem, size = 0xc000, scoped, tag = 'input window, operand 0']
    #allocation3 [shape = 's32[2]{0}', space=sflag, size = 0x8, scoped, tag = 'scoped memory for tpu_custom_call.1']
    %9 = vsyncpa [#allocation3], 0
    %s10 = scalar_lea.sflag [#allocation3], 1
    %11 = vsyncpa %s10, 0
    loop: start=0, step=1, limit=4
    $region2: #{tpu_custom_call.1} parent=1 // loop_pre_header
      _
    $region3: #{tpu_custom_call.1} parent=1 // loop_header
      %s13 = sphi 0, %s17
      %p14 = scmp.ge.s32.totalorder %s13, 4
      %s23 = sphi 0, %s25
      %s26 = sphi 0, %s23
      %s27 = sphi 0, %s26
      %s43 = sphi 0, %s27
      %s47 = sphi 0, %s47
      %s49 = sphi 0, %s47
      %s50 = sphi 0, %s49
      %s64 = sphi 0, %s50
      %s68 = sphi 0, %s68
      %s70 = sphi 0, %s68
      %s71 = sphi 0, %s70
      %s85 = sphi 0, %s71
      %s89 = sphi 0, %s89
      %s91 = sphi 0, %s89
      %s92 = sphi 0, %s91
      %s106 = sphi 0, %s92
      %s112 = sphi 0, %s114
      %s115 = sphi 0, %s112
      %s116 = sphi 0, %s115
      %s132 = sphi 0, %s116
    $region4: #{tpu_custom_call.1} parent=1 // loop_header_branch
      %16 = sbr.rel (%p14) target = $region8
    $region5: #{tpu_custom_call.1} parent=1 // loop_body
      %s18 = ssub.s32 %s13, 1
      %s19 = ssub.s32 %s13, 2
      %s20 = sadd.s32 %s13, 1
      %s21 = ssub.s32 %s13, %s20
      %p22 = scmp.eq.s32.totalorder %s21, 0
      %s24 = sadd.s32 %s23, 1
      %s25 = scalar_select %p22, %s23, %s24
      %p28 = pneg %p22
      %p29 = scmp.eq.s32.totalorder %s13, 1
      %p30 = por %p28, %p29
      %p31 = scmp.ne.s32.totalorder %s23, %s26
      %p32 = scmp.eq.s32.totalorder %s13, 0
      %p33 = por %p31, %p32
      %p34 = scmp.ne.s32.totalorder %s23, %s26
      %p35 = scmp.eq.s32.totalorder %s18, 1
      %p36 = por %p34, %p35
      %p37 = scmp.ne.s32.totalorder %s26, %s27
      %p38 = scmp.eq.s32.totalorder %s18, 0
      %p39 = por %p37, %p38
      %p40 = scmp.ne.s32.totalorder %s26, %s27
      %p41 = scmp.eq.s32.totalorder %s19, 1
      %p42 = por %p40, %p41
      %p44 = scmp.ne.s32.totalorder %s27, %s43
      %p45 = scmp.eq.s32.totalorder %s19, 0
      %p46 = por %p44, %p45
      %s48 = sadd.s32 %s47, 1
      %p51 = scmp.eq.s32.totalorder %s13, 1
      %p52 = scmp.ne.s32.totalorder %s47, %s49
      %p53 = scmp.eq.s32.totalorder %s13, 0
      %p54 = por %p52, %p53
      %p55 = scmp.ne.s32.totalorder %s47, %s49
      %p56 = scmp.eq.s32.totalorder %s18, 1
      %p57 = por %p55, %p56
      %p58 = scmp.ne.s32.totalorder %s49, %s50
      %p59 = scmp.eq.s32.totalorder %s18, 0
      %p60 = por %p58, %p59
      %p61 = scmp.ne.s32.totalorder %s49, %s50
      %p62 = scmp.eq.s32.totalorder %s19, 1
      %p63 = por %p61, %p62
      %p65 = scmp.ne.s32.totalorder %s50, %s64
      %p66 = scmp.eq.s32.totalorder %s19, 0
      %p67 = por %p65, %p66
      %s69 = sadd.s32 %s68, 1
      %p72 = scmp.eq.s32.totalorder %s13, 1
      %p73 = scmp.ne.s32.totalorder %s68, %s70
      %p74 = scmp.eq.s32.totalorder %s13, 0
      %p75 = por %p73, %p74
      %p76 = scmp.ne.s32.totalorder %s68, %s70
      %p77 = scmp.eq.s32.totalorder %s18, 1
      %p78 = por %p76, %p77
      %p79 = scmp.ne.s32.totalorder %s70, %s71
      %p80 = scmp.eq.s32.totalorder %s18, 0
      %p81 = por %p79, %p80
      %p82 = scmp.ne.s32.totalorder %s70, %s71
      %p83 = scmp.eq.s32.totalorder %s19, 1
      %p84 = por %p82, %p83
      %p86 = scmp.ne.s32.totalorder %s71, %s85
      %p87 = scmp.eq.s32.totalorder %s19, 0
      %p88 = por %p86, %p87
      %s90 = sadd.s32 %s89, 1
      %p93 = scmp.eq.s32.totalorder %s13, 1
      %p94 = scmp.ne.s32.totalorder %s89, %s91
      %p95 = scmp.eq.s32.totalorder %s13, 0
      %p96 = por %p94, %p95
      %p97 = scmp.ne.s32.totalorder %s89, %s91
      %p98 = scmp.eq.s32.totalorder %s18, 1
      %p99 = por %p97, %p98
      %p100 = scmp.ne.s32.totalorder %s91, %s92
      %p101 = scmp.eq.s32.totalorder %s18, 0
      %p102 = por %p100, %p101
      %p103 = scmp.ne.s32.totalorder %s91, %s92
      %p104 = scmp.eq.s32.totalorder %s19, 1
      %p105 = por %p103, %p104
      %p107 = scmp.ne.s32.totalorder %s92, %s106
      %p108 = scmp.eq.s32.totalorder %s19, 0
      %p109 = por %p107, %p108
      %s110 = ssub.s32 %s13, %s20
      %p111 = scmp.eq.s32.totalorder %s110, 0
      %s113 = sadd.s32 %s112, 1
      %s114 = scalar_select %p111, %s112, %s113
      %p117 = pneg %p111
      %p118 = scmp.eq.s32.totalorder %s13, 1
      %p119 = por %p117, %p118
      %p120 = scmp.ne.s32.totalorder %s112, %s115
      %p121 = scmp.eq.s32.totalorder %s13, 0
      %p122 = por %p120, %p121
      %p123 = scmp.ne.s32.totalorder %s112, %s115
      %p124 = scmp.eq.s32.totalorder %s18, 1
      %p125 = por %p123, %p124
      %p126 = scmp.ne.s32.totalorder %s115, %s116
      %p127 = scmp.eq.s32.totalorder %s18, 0
      %p128 = por %p126, %p127
      %p129 = scmp.ne.s32.totalorder %s115, %s116
      %p130 = scmp.eq.s32.totalorder %s19, 1
      %p131 = por %p129, %p130
      %p133 = scmp.ne.s32.totalorder %s116, %s132
      %p134 = scmp.eq.s32.totalorder %s19, 0
      %p135 = por %p133, %p134
      %p136 = scmp.le.s32.totalorder 1, %s13
      %p137 = scmp.lt.s32.totalorder %s13, 3
      %p138 = pnand %p136, %p137
      %p139 = pneg %p138
      // Predicated region
      $region9: #{tpu_custom_call.1} parent=5 // pred_check
        _
      $region10: #{tpu_custom_call.1} parent=5 // pred_check_branch
        %141 = sbr.rel (%p138) target = $region12
      $region11: #{tpu_custom_call.1} parent=5 // pred_region
        %s142 = ssub.s32 %s13, 1
        // Predicated region
        $region13: #{tpu_custom_call.1} parent=11 // pred_check
          %p143 = pneg %p60
        $region14: #{tpu_custom_call.1} parent=11 // pred_check_branch
          %145 = sbr.rel (%p143) target = $region16
        $region15: #{tpu_custom_call.1} parent=11 // pred_region
          _
        $region16: #{tpu_custom_call.1} parent=11 // pred_fallthru
          _
        // Predicated region
        $region17: #{tpu_custom_call.1} parent=11 // pred_check
          %p146 = pneg %p81
        $region18: #{tpu_custom_call.1} parent=11 // pred_check_branch
          %148 = sbr.rel (%p146) target = $region20
        $region19: #{tpu_custom_call.1} parent=11 // pred_region
          _
        $region20: #{tpu_custom_call.1} parent=11 // pred_fallthru
          _
        // Predicated region
        $region21: #{tpu_custom_call.1} parent=11 // pred_check
          %p149 = pneg %p102
        $region22: #{tpu_custom_call.1} parent=11 // pred_check_branch
          %151 = sbr.rel (%p149) target = $region24
        $region23: #{tpu_custom_call.1} parent=11 // pred_region
          _
        $region24: #{tpu_custom_call.1} parent=11 // pred_fallthru
          _
      $region12: #{tpu_custom_call.1} parent=5 // pred_fallthru
        _
      %p152 = scmp.lt.s32.totalorder %s13, 2
      // Predicated region
      $region25: #{tpu_custom_call.1} parent=5 // pred_check
        %p153 = pneg %p152
      $region26: #{tpu_custom_call.1} parent=5 // pred_check_branch
        %155 = sbr.rel (%p153) target = $region28
      $region27: #{tpu_custom_call.1} parent=5 // pred_region
        // Predicated region
        $region29: #{tpu_custom_call.1} parent=27 // pred_check
          %p156 = pneg %p33
        $region30: #{tpu_custom_call.1} parent=27 // pred_check_branch
          %158 = sbr.rel (%p156) target = $region32
        $region31: #{tpu_custom_call.1} parent=27 // pred_region
          %s159 = sand.u32 %s23, 1
          %s160 = scalar_lea.sflag [#allocation3], %s159
          %s161 = sand.u32 %s23, 1
          %s162 = smul.addr %s161, 48
          %s163 = scalar_lea.vmem [#allocation2], %s162
          %s165 = ssub.s32 768, 768
          %166 = vsyncadd %s160, %s165
          %s167 = smul.addr %s13, 6
          %s168 = smul.addr %s167, 128
          %s169 = scalar_lea.hbm %s0, %s168
          %s170 = sshll.u32 %s163, 4
          %s171 = int_to_ptr.vmem [resolvable:$true] %s170
          %176 = dma.hbm_to_vmem [thread:$0]  %s169, 768, %s171, %s160, 128, 128, 8
        $region32: #{tpu_custom_call.1} parent=27 // pred_fallthru
          _
      $region28: #{tpu_custom_call.1} parent=5 // pred_fallthru
        _
      %p177 = scmp.le.s32.totalorder 1, %s13
      %p178 = scmp.lt.s32.totalorder %s13, 3
      %p179 = pnand %p177, %p178
      %p180 = pneg %p179
      // Predicated region
      $region33: #{tpu_custom_call.1} parent=5 // pred_check
        _
      $region34: #{tpu_custom_call.1} parent=5 // pred_check_branch
        %182 = sbr.rel (%p179) target = $region36
      $region35: #{tpu_custom_call.1} parent=5 // pred_region
        %s183 = ssub.s32 %s13, 1
        %s184 = sand.u32 %s26, 1
        %s185 = scalar_lea.sflag [#allocation3], %s184
        %s186 = sand.u32 %s26, 1
        %s187 = smul.addr %s186, 48
        %s188 = scalar_lea.vmem [#allocation2], %s187
        // Predicated region
        $region37: #{tpu_custom_call.1} parent=35 // pred_check
          %p189 = pneg %p39
        $region38: #{tpu_custom_call.1} parent=35 // pred_check_branch
          %191 = sbr.rel (%p189) target = $region40
        $region39: #{tpu_custom_call.1} parent=35 // pred_region
          %192 = dma.done %s185, 768
        $region40: #{tpu_custom_call.1} parent=35 // pred_fallthru
          _
        %s193 = sand.u32 %s26, 1
        %s194 = scalar_lea.sflag [#allocation3], %s193
        %s195 = sand.u32 %s26, 1
        %s196 = smul.addr %s195, 48
        %s197 = scalar_lea.vmem [#allocation2], %s196
        %p198 = pneg %p39
        %p199 = pneg %p36
        %p200 = pneg %p60
        %p201 = pneg %p57
        %p202 = pneg %p81
        %p203 = pneg %p78
        %p204 = pneg %p102
        %p205 = pneg %p99
        %p206 = pneg %p128
        %p207 = pneg %p125
        %p208 = scmp.lt.s32.totalorder %s18, 1
        %s209 = scalar_select %p208, %s18, 1
        %s210 = smul.addr %s209, 4
        %s211 = smul.addr %s210, 8
        %s212 = scalar_lea.vmem %s4, %s211
        %p213 = scmp.lt.s32.totalorder %s18, 1
        %s214 = scalar_select %p213, %s18, 1
        %s215 = smul.addr %s214, 4
        %s216 = smul.addr %s215, 8
        %s217 = scalar_lea.vmem %s4, %s216
        %v218 = vld [vmem:[%s188] sm:$0xff]
        %v219 = vld [vmem:[%s188 + $0x8] sm:$0xff]
        %v220 = vld [vmem:[%s188 + $0x10] sm:$0xff]
        %v221 = vld [vmem:[%s188 + $0x18] sm:$0xff]
        %v222 = vld [vmem:[%s188 + $0x20] sm:$0xff]
        %v223 = vld [vmem:[%s188 + $0x28] sm:$0xff]
        %v224 = vld [vmem:[%s1] sm:$0xff]
        %v225 = vld [vmem:[%s1 + $0x8] sm:$0xff]
        %vm226 = vcmask 130048
        %v228 = vsel %vm226, %v218, 0
        %v231 = vsel %vm226, %v219, 0
        %v234 = vsel %vm226, %v220, 0
        %v237 = vsel %vm226, %v221, 0
        %v240 = vsel %vm226, %v222, 0
        %v243 = vsel %vm226, %v223, 0
        %245 = vmatprep.subr.mxu0 0.0
        %246 = vmatpush1.msra.mxu0 %v224
        %247 = vmatprep.subr.mxu0 0.0
        %248 = vmatpush1.msra.mxu0 %v225
        %249 = vmatprep.subr.mxu0 0.0
        %250 = vmatpush1.msra.mxu0 0.0
        %251 = vmatprep.subr.mxu0 0.0
        %252 = vmatpush1.msra.mxu0 0.0
        %253 = vmatprep.subr.mxu0 0.0
        %254 = vmatpush1.msra.mxu0 0.0
        %255 = vmatprep.subr.mxu0 0.0
        %256 = vmatpush1.msra.mxu0 0.0
        %257 = vmatprep.subr.mxu0 0.0
        %258 = vmatpush1.msra.mxu0 0.0
        %259 = vmatprep.subr.mxu0 0.0
        %260 = vmatpush1.msra.mxu0 0.0
        %261 = vmatprep.subr.mxu0 0.0
        %262 = vmatpush1.msra.mxu0 0.0
        %263 = vmatprep.subr.mxu0 0.0
        %264 = vmatpush1.msra.mxu0 0.0
        %265 = vmatprep.subr.mxu0 0.0
        %266 = vmatpush1.msra.mxu0 0.0
        %267 = vmatprep.subr.mxu0 0.0
        %268 = vmatpush1.msra.mxu0 0.0
        %269 = vmatprep.subr.mxu0 0.0
        %270 = vmatpush1.msra.mxu0 0.0
        %271 = vmatprep.subr.mxu0 0.0
        %272 = vmatpush1.msra.mxu0 0.0
        %273 = vmatprep.subr.mxu0 0.0
        %274 = vmatpush1.msra.mxu0 0.0
        %275 = vmatprep.subr.mxu0 0.0
        %276 = vmatpush1.msra.mxu0 0.0
        %277 = vmatprep.subr.mxu0 0.0
        %278 = vmatpush1.msra.mxu0 0.0
        %279 = vmatprep.subr.mxu0 0.0
        %280 = vmatpush1.msra.mxu0 0.0
        %281 = vmatprep.subr.mxu0 0.0
        %282 = vmatpush1.msra.mxu0 0.0
        %283 = vmatprep.subr.mxu0 0.0
        %284 = vmatpush1.msra.mxu0 0.0
        %285 = vmatprep.subr.mxu0 0.0
        %286 = vmatpush1.msra.mxu0 0.0
        %287 = vmatprep.subr.mxu0 0.0
        %288 = vmatpush1.msra.mxu0 0.0
        %289 = vmatprep.subr.mxu0 0.0
        %290 = vmatpush1.msra.mxu0 0.0
        %291 = vmatprep.subr.mxu0 0.0
        %292 = vmatpush1.msra.mxu0 0.0
        %293 = vmatprep.subr.mxu0 0.0
        %294 = vmatpush1.msra.mxu0 0.0
        %295 = vmatprep.subr.mxu0 0.0
        %296 = vmatpush1.msra.mxu0 0.0
        %297 = vmatprep.subr.mxu0 0.0
        %298 = vmatpush1.msra.mxu0 0.0
        %299 = vmatprep.subr.mxu0 0.0
        %300 = vmatpush1.msra.mxu0 0.0
        %301 = vmatprep.subr.mxu0 0.0
        %302 = vmatpush1.msra.mxu0 0.0
        %303 = vmatprep.subr.mxu0 0.0
        %304 = vmatpush1.msra.mxu0 0.0
        %305 = vmatprep.subr.mxu0 0.0
        %306 = vmatpush1.msra.mxu0 0.0
        %307 = vmatprep.subr.mxu0 0.0
        %308 = vmatpush1.msra.mxu0 0.0
        %309 = vmatprep.mubr.f32.mxu0 0.0
        %310 = vmatmul.mubr.f32.gmra.mrb[0].mxu0 %v228
        %v311 = vpop.f32.mrb[0].mxu0
        %v312 = vadd.f32 0.0, %v311
        %v313 = vpop.f32.mrb[0].mxu0
        %314 = vmatprep.mubr.f32.mxu0 0.0
        %315 = vmatmul.mubr.f32.gmra.mrb[0].mxu0 %v231
        %v316 = vpop.f32.mrb[0].mxu0
        %v317 = vadd.f32 0.0, %v316
        %v318 = vpop.f32.mrb[0].mxu0
        %319 = vmatprep.mubr.f32.mxu0 0.0
        %320 = vmatmul.mubr.f32.gmra.mrb[0].mxu0 %v234
        %v321 = vpop.f32.mrb[0].mxu0
        %v322 = vadd.f32 0.0, %v321
        %v323 = vpop.f32.mrb[0].mxu0
        %324 = vmatprep.mubr.f32.mxu0 0.0
        %325 = vmatmul.mubr.f32.gmra.mrb[0].mxu0 %v237
        %v326 = vpop.f32.mrb[0].mxu0
        %v327 = vadd.f32 0.0, %v326
        %v328 = vpop.f32.mrb[0].mxu0
        %329 = vmatprep.mubr.f32.mxu0 0.0
        %330 = vmatmul.mubr.f32.gmra.mrb[0].mxu0 %v240
        %v331 = vpop.f32.mrb[0].mxu0
        %v332 = vadd.f32 0.0, %v331
        %v333 = vpop.f32.mrb[0].mxu0
        %334 = vmatprep.mubr.f32.mxu0 0.0
        %335 = vmatmul.mubr.f32.gmra.mrb[0].mxu0 %v243
        %v336 = vpop.f32.mrb[0].mxu0
        %v337 = vadd.f32 0.0, %v336
        %v338 = vpop.f32.mrb[0].mxu0
        %339 = vdwg.mxu0
        %v340 = vld [vmem:[%s2] sm:$0xff]
        %v341 = vld [vmem:[%s2 + $0x8] sm:$0xff]
        %v342 = vld [vmem:[%s2 + $0x10] sm:$0xff]
        %v343 = vld [vmem:[%s2 + $0x18] sm:$0xff]
        %v344 = vld [vmem:[%s3] sm:$0xff]
        %v345 = vld [vmem:[%s3 + $0x8] sm:$0xff]
        %v346 = vld [vmem:[%s3 + $0x10] sm:$0xff]
        %v347 = vld [vmem:[%s3 + $0x18] sm:$0xff]
        %349 = vset.pattern.permute.xlu0 0
        %350 = vperm.xlu0 %349, %v344
        %v351 = vpop.permute.xlu0 %350
        %354 = vset.pattern.permute.xlu0 0
        %355 = vperm.xlu0 %354, %v345
        %v356 = vpop.permute.xlu0 %355
        %359 = vset.pattern.permute.xlu0 0
        %360 = vperm.xlu0 %359, %v346
        %v361 = vpop.permute.xlu0 %360
        %364 = vset.pattern.permute.xlu0 0
        %365 = vperm.xlu0 %364, %v347
        %v366 = vpop.permute.xlu0 %365
        %vm368 = vcmask 392192
        %v370 = vsel %vm368, %v340, 0
        %v373 = vsel %vm368, %v341, 0
        %v376 = vsel %vm368, %v342, 0
        %v379 = vsel %vm368, %v343, 0
        %381 = vmatprep.subr.mxu0 0.0
        %382 = vmatpush1.msra.mxu0 %v312
        %383 = vmatprep.subr.mxu0 0.0
        %384 = vmatpush1.msra.mxu0 %v317
        %385 = vmatprep.subr.mxu0 0.0
        %386 = vmatpush1.msra.mxu0 %v322
        %387 = vmatprep.subr.mxu0 0.0
        %388 = vmatpush1.msra.mxu0 %v327
        %389 = vmatprep.subr.mxu0 0.0
        %390 = vmatpush1.msra.mxu0 %v332
        %391 = vmatprep.subr.mxu0 0.0
        %392 = vmatpush1.msra.mxu0 %v337
        %393 = vmatprep.subr.mxu0 0.0
        %394 = vmatpush1.msra.mxu0 0.0
        %395 = vmatprep.subr.mxu0 0.0
        %396 = vmatpush1.msra.mxu0 0.0
        %397 = vmatprep.subr.mxu0 0.0
        %398 = vmatpush1.msra.mxu0 0.0
        %399 = vmatprep.subr.mxu0 0.0
        %400 = vmatpush1.msra.mxu0 0.0
        %401 = vmatprep.subr.mxu0 0.0
        %402 = vmatpush1.msra.mxu0 0.0
        %403 = vmatprep.subr.mxu0 0.0
        %404 = vmatpush1.msra.mxu0 0.0
        %405 = vmatprep.subr.mxu0 0.0
        %406 = vmatpush1.msra.mxu0 0.0
        %407 = vmatprep.subr.mxu0 0.0
        %408 = vmatpush1.msra.mxu0 0.0
        %409 = vmatprep.subr.mxu0 0.0
        %410 = vmatpush1.msra.mxu0 0.0
        %411 = vmatprep.subr.mxu0 0.0
        %412 = vmatpush1.msra.mxu0 0.0
        %413 = vmatprep.subr.mxu0 0.0
        %414 = vmatpush1.msra.mxu0 0.0
        %415 = vmatprep.subr.mxu0 0.0
        %416 = vmatpush1.msra.mxu0 0.0
        %417 = vmatprep.subr.mxu0 0.0
        %418 = vmatpush1.msra.mxu0 0.0
        %419 = vmatprep.subr.mxu0 0.0
        %420 = vmatpush1.msra.mxu0 0.0
        %421 = vmatprep.subr.mxu0 0.0
        %422 = vmatpush1.msra.mxu0 0.0
        %423 = vmatprep.subr.mxu0 0.0
        %424 = vmatpush1.msra.mxu0 0.0
        %425 = vmatprep.subr.mxu0 0.0
        %426 = vmatpush1.msra.mxu0 0.0
        %427 = vmatprep.subr.mxu0 0.0
        %428 = vmatpush1.msra.mxu0 0.0
        %429 = vmatprep.subr.mxu0 0.0
        %430 = vmatpush1.msra.mxu0 0.0
        %431 = vmatprep.subr.mxu0 0.0
        %432 = vmatpush1.msra.mxu0 0.0
        %433 = vmatprep.subr.mxu0 0.0
        %434 = vmatpush1.msra.mxu0 0.0
        %435 = vmatprep.subr.mxu0 0.0
        %436 = vmatpush1.msra.mxu0 0.0
        %437 = vmatprep.subr.mxu0 0.0
        %438 = vmatpush1.msra.mxu0 0.0
        %439 = vmatprep.subr.mxu0 0.0
        %440 = vmatpush1.msra.mxu0 0.0
        %441 = vmatprep.subr.mxu0 0.0
        %442 = vmatpush1.msra.mxu0 0.0
        %443 = vmatprep.subr.mxu0 0.0
        %444 = vmatpush1.msra.mxu0 0.0
        %445 = vmatprep.mubr.f32.mxu0 0.0
        %446 = vmatmul.mubr.f32.gmra.mrb[0].mxu0 %v370
        %v447 = vpop.f32.mrb[0].mxu0
        %v448 = vadd.f32 %v351, %v447
        %v449 = vpop.f32.mrb[0].mxu0
        %450 = vmatprep.mubr.f32.mxu0 0.0
        %451 = vmatmul.mubr.f32.gmra.mrb[0].mxu0 %v373
        %v452 = vpop.f32.mrb[0].mxu0
        %v453 = vadd.f32 %v356, %v452
        %v454 = vpop.f32.mrb[0].mxu0
        %455 = vmatprep.mubr.f32.mxu0 0.0
        %456 = vmatmul.mubr.f32.gmra.mrb[0].mxu0 %v376
        %v457 = vpop.f32.mrb[0].mxu0
        %v458 = vadd.f32 %v361, %v457
        %v459 = vpop.f32.mrb[0].mxu0
        %460 = vmatprep.mubr.f32.mxu0 0.0
        %461 = vmatmul.mubr.f32.gmra.mrb[0].mxu0 %v379
        %v462 = vpop.f32.mrb[0].mxu0
        %v463 = vadd.f32 %v366, %v462
        %v464 = vpop.f32.mrb[0].mxu0
        %465 = vdwg.mxu0
        %vm466 = vcmask 64512
        %467 = vst.msk [vmem:[%s217] sm:$0xff] %vm466, %v448
        %468 = vst.msk [vmem:[%s217 + $0x8] sm:$0xff] %vm466, %v453
        %469 = vst.msk [vmem:[%s217 + $0x10] sm:$0xff] %vm466, %v458
        %470 = vst.msk [vmem:[%s217 + $0x18] sm:$0xff] %vm466, %v463
        %p471 = scmp.lt.s32.totalorder %s18, 1
        %s472 = scalar_select %p471, %s18, 1
        %s473 = smul.addr %s472, 4
        %s474 = smul.addr %s473, 8
        %s475 = scalar_lea.vmem %s4, %s474
        // Predicated region
        $region41: #{tpu_custom_call.1} parent=35 // pred_check
          %p476 = pneg %p125
        $region42: #{tpu_custom_call.1} parent=35 // pred_check_branch
          %478 = sbr.rel (%p476) target = $region44
        $region43: #{tpu_custom_call.1} parent=35 // pred_region
          _
        $region44: #{tpu_custom_call.1} parent=35 // pred_fallthru
          _
      $region36: #{tpu_custom_call.1} parent=5 // pred_fallthru
        _
      %p479 = scmp.le.s32.totalorder 2, %s13
      // Predicated region
      $region45: #{tpu_custom_call.1} parent=5 // pred_check
        %p480 = pneg %p479
      $region46: #{tpu_custom_call.1} parent=5 // pred_check_branch
        %482 = sbr.rel (%p480) target = $region48
      $region47: #{tpu_custom_call.1} parent=5 // pred_region
        %s483 = ssub.s32 %s13, 2
        // Predicated region
        $region49: #{tpu_custom_call.1} parent=47 // pred_check
          %p484 = pneg %p131
        $region50: #{tpu_custom_call.1} parent=47 // pred_check_branch
          %486 = sbr.rel (%p484) target = $region52
        $region51: #{tpu_custom_call.1} parent=47 // pred_region
          %p487 = scmp.lt.s32.totalorder %s19, 1
          %s488 = scalar_select %p487, %s19, 1
          %s489 = smul.addr %s488, 4
          %s490 = smul.addr %s489, 8
          %s491 = scalar_lea.vmem %s4, %s490
        $region52: #{tpu_custom_call.1} parent=47 // pred_fallthru
          _
      $region48: #{tpu_custom_call.1} parent=5 // pred_fallthru
        _
    $region6: #{tpu_custom_call.1} parent=1 // loop_footer
      %s17 = sadd.s32 1, %s13
    $region7: #{tpu_custom_call.1} parent=1 // loop_footer_branch
      %12 = sbr.rel target = $region3
    $region8: #{tpu_custom_call.1} parent=1 // loop_exit
      _
    %492 = vsyncpa [#allocation3], 1
    %s493 = scalar_lea.sflag [#allocation3], 1
    %494 = vsyncpa %s493, 1

</llo_original>
